<compile_context>
chip_gen: v6e
topology: v6e:2x2x1
jax: 0.10.0
libtpu: 0.0.40
codegen_flags: <defaults>
</compile_context>

<pallas_src>
import functools

import jax
import jax.numpy as jnp
from jax.experimental import pallas as pl
from jax.experimental.pallas import tpu as pltpu


def _netpolicy_rollout_kernel(
    obs_ref, h0_ref, mask_ref,            # per-step inputs / initial hidden state
    w_x_ref, w_h_ref, b_in_ref,           # stand-in net params
    w_head_ref, b_head_ref,               # fused action + critic heads [Wa | Wc]
    out_ref, h_ref,                       # outputs: packed slab (per step), hidden carry
    *, num_actions,
):
    t = pl.program_id(1)

    # h_ref (the hidden-state output block) stays VMEM-resident across the
    # whole time axis for this batch block -> it doubles as the recurrent
    # carry. Seed it from the initial hidden state at the first step.
    @pl.when(t == 0)
    def _():
        h_ref[...] = h0_ref[...].astype(h_ref.dtype)

    f32 = jnp.float32
    obs = obs_ref[...].astype(f32)
    h_prev = h_ref[...].astype(f32) * mask_ref[...].astype(f32)

    # net: feat = tanh(obs @ Wx + (h * mask) @ Wh + b)
    # Two MXU dots summed in f32 (no lane concat of [obs | h]).
    wdt = w_x_ref.dtype
    feat = jnp.tanh(
        jnp.dot(obs.astype(wdt), w_x_ref[...], preferred_element_type=f32)
        + jnp.dot(h_prev.astype(wdt), w_h_ref[...], preferred_element_type=f32)
        + b_in_ref[...].astype(f32)
    )
    h_ref[...] = feat.astype(h_ref.dtype)          # carry + final hidden output

    # fused heads: [logits | value] = feat @ [Wa | Wc] + [ba | bc]
    head = (
        jnp.dot(feat.astype(w_head_ref.dtype), w_head_ref[...],
                preferred_element_type=f32)
        + b_head_ref[...].astype(f32)
    )
    logits = head[:, :num_actions]                         # (block_b, A)
    value = head[:, num_actions:num_actions + 1]           # (block_b, 1)

    # deterministic action = distribution.mode() == argmax (first max index)
    max_l = jnp.max(logits, axis=-1, keepdims=True)
    lane = jax.lax.broadcasted_iota(jnp.int32, logits.shape, 1)
    action = jnp.min(jnp.where(logits == max_l, lane, num_actions),
                     axis=-1, keepdims=True)
    action = jnp.minimum(action, num_actions - 1)          # guard non-finite logits

    # log_softmax(logits)[argmax] == -log(sum(exp(logits - max)))
    logp = -jnp.log(jnp.sum(jnp.exp(logits - max_l), axis=-1, keepdims=True))

    # packed lane-dense (block_b, 128) slab: lane0=value, lane1=logp, lane2=action
    out_ref[...] = jnp.zeros_like(out_ref)
    out_ref[:, 0:1] = value
    out_ref[:, 1:2] = logp
    out_ref[:, 2:3] = action.astype(f32)


def _pick_batch_block(batch):
    # Largest batch block <= 512 that tiles B; prefer >= 2 blocks for larger
    # batches so the "parallel" axis can span both v7x TensorCores.
    if batch <= 256:
        return batch
    for cand in (512, 256, 128, 64, 32, 16, 8):
        if cand <= batch // 2 and batch % cand == 0:
            return cand
    return batch


def init_params(key, obs_dim, hidden, num_actions, weight_dtype=jnp.bfloat16):
    # weight_dtype=jnp.bfloat16: MXU-native path (f32 accumulation).
    # weight_dtype=jnp.float32: numerically faithful to the f32 torch module.
    ks = jax.random.split(key, 4)
    scale = 0.1
    wx = scale * jax.random.normal(ks[0], (obs_dim, hidden), jnp.float32)
    wh = scale * jax.random.normal(ks[1], (hidden, hidden), jnp.float32)
    wa = scale * jax.random.normal(ks[2], (hidden, num_actions), jnp.float32)   # CategoricalNet
    wc = scale * jax.random.normal(ks[3], (hidden, 1), jnp.float32)             # CriticHead
    return dict(
        w_x=wx.astype(weight_dtype),
        w_h=wh.astype(weight_dtype),
        b_in=jnp.zeros((1, hidden), jnp.float32),
        w_head=jnp.concatenate([wa, wc], axis=1).astype(weight_dtype),   # (H, A+1)
        b_head=jnp.zeros((1, num_actions + 1), jnp.float32),             # [ba | bc]
    )


@functools.partial(jax.jit, donate_argnums=(1,))
def net_policy_act_rollout(observations, rnn_hidden_states, prev_actions, masks, params):
    """T fused NetPolicy.act(..., deterministic=True) steps in one pallas_call.

    observations: (T, B, obs_dim), masks: (T, B, 1), prev_actions: unused.
    rnn_hidden_states: (B, H) float32 -- DONATED (updated in place via
    input_output_aliases); do not reuse the caller's buffer after this call.
    Returns (values (T,B,1), actions (T,B,1) int32, log_probs (T,B,1), h_out (B,H)).
    """
    del prev_actions   # the stand-in net does not embed previous actions
    T, B, obs_dim = observations.shape
    H = rnn_hidden_states.shape[-1]
    A = params["w_head"].shape[-1] - 1

    block_b = _pick_batch_block(B)
    nb = B // block_b
    # Time axis innermost + sequential ("arbitrary"): hidden carried in the
    # VMEM-resident h_out block; batch axis "parallel" (v7x megacore).
    grid = (nb, T)

    # NOTE(v7x): only 64 MiB physical / 32 MiB scoped VMEM; if H or block_b are
    # scaled up (H >= 2048, block_b >= 512), shrink block_b and/or K-tile Wh
    # over an extra "arbitrary" contraction axis, and set vmem_limit_bytes.
    flops = 2 * T * B * H * (obs_dim + H + A + 1)
    bytes_accessed = (
        observations.size * observations.dtype.itemsize
        + masks.size * masks.dtype.itemsize
        + rnn_hidden_states.size * 4 * 2
        + sum(int(v.size) * v.dtype.itemsize for v in params.values())
        + T * B * 128 * 4
    )
    cost = pl.CostEstimate(
        flops=flops,
        transcendentals=T * B * (H + A + 1),     # tanh + exp + log
        bytes_accessed=bytes_accessed,
    )

    out_slab, h_out = pl.pallas_call(
        functools.partial(_netpolicy_rollout_kernel, num_actions=A),
        out_shape=(
            jax.ShapeDtypeStruct((T, B, 128), jnp.float32),   # packed value/logp/action
            jax.ShapeDtypeStruct((B, H), jnp.float32),        # new rnn_hidden_states
        ),
        grid=grid,
        in_specs=[
            pl.BlockSpec((None, block_b, obs_dim), lambda b, t: (t, b, 0)),
            pl.BlockSpec((block_b, H), lambda b, t: (b, 0)),
            pl.BlockSpec((None, block_b, 1), lambda b, t: (t, b, 0)),
            pl.BlockSpec((obs_dim, H), lambda b, t: (0, 0)),      # weights stay
            pl.BlockSpec((H, H), lambda b, t: (0, 0)),            # VMEM-resident
            pl.BlockSpec((1, H), lambda b, t: (0, 0)),
            pl.BlockSpec((H, A + 1), lambda b, t: (0, 0)),
            pl.BlockSpec((1, A + 1), lambda b, t: (0, 0)),
        ],
        out_specs=(
            pl.BlockSpec((None, block_b, 128), lambda b, t: (t, b, 0)),
            pl.BlockSpec((block_b, H), lambda b, t: (b, 0)),
        ),
        # in-place hidden-state update (effective because arg 1 is donated)
        input_output_aliases={1: 1},
        compiler_params=pltpu.CompilerParams(
            dimension_semantics=("parallel", "arbitrary"),
        ),
        cost_estimate=cost,
    )(
        observations, rnn_hidden_states, masks,
        params["w_x"], params["w_h"], params["b_in"],
        params["w_head"], params["b_head"],
    )

    values = out_slab[:, :, 0:1]
    log_probs = out_slab[:, :, 1:2]
    actions = out_slab[:, :, 2:3].astype(jnp.int32)   # exact: small ints in f32
    return values, actions, log_probs, h_out


def net_policy_act(observations, rnn_hidden_states, prev_actions, masks, params):
    """Single NetPolicy.act(deterministic=True) step (T == 1 rollout).

    NOTE: rnn_hidden_states is donated (updated in place).
    """
    v, a, lp, h = net_policy_act_rollout(
        observations[None], rnn_hidden_states, prev_actions[None], masks[None], params
    )
    return v[0], a[0], lp[0], h


if __name__ == "__main__":
    T, B, OBS_DIM, HIDDEN, NUM_ACTIONS = 4, 8, 32, 128, 4

    key = jax.random.PRNGKey(0)
    k_obs, k_h, k_mask, k_params = jax.random.split(key, 4)

    obs_T = jax.random.normal(k_obs, (T, B, OBS_DIM), jnp.float32)
    h0 = jax.random.normal(k_h, (B, HIDDEN), jnp.float32)
    prev_actions = jnp.zeros((T, B, 1), jnp.int32)
    masks_T = (jax.random.uniform(k_mask, (T, B, 1)) > 0.2).astype(jnp.float32)

    params = init_params(k_params, OBS_DIM, HIDDEN, NUM_ACTIONS,
                         weight_dtype=jnp.bfloat16)

    # --- pure-JAX per-step reference (same bf16-input / f32-accum numerics) --
    # Computed BEFORE the kernel calls because rnn_hidden_states is donated.
    wdt = params["w_x"].dtype
    h = h0
    ref_vals, ref_acts, ref_lps, ref_feats = [], [], [], []
    for t in range(T):
        hp = (h * masks_T[t]).astype(wdt)
        feat = jnp.tanh(
            jnp.dot(obs_T[t].astype(wdt), params["w_x"],
                    preferred_element_type=jnp.float32)
            + jnp.dot(hp, params["w_h"], preferred_element_type=jnp.float32)
            + params["b_in"])
        head = (jnp.dot(feat.astype(wdt), params["w_head"],
                        preferred_element_type=jnp.float32)
                + params["b_head"])
        logits = head[:, :NUM_ACTIONS]
        act = jnp.argmax(logits, axis=-1, keepdims=True).astype(jnp.int32)
        ref_vals.append(head[:, NUM_ACTIONS:NUM_ACTIONS + 1])
        ref_acts.append(act)
        ref_lps.append(jnp.take_along_axis(
            jax.nn.log_softmax(logits, axis=-1), act, axis=-1))
        ref_feats.append(feat)
        h = feat
    ref_vals = jnp.stack(ref_vals)
    ref_acts = jnp.stack(ref_acts)
    ref_lps = jnp.stack(ref_lps)
    ref_h = h
    jax.block_until_ready((ref_vals, ref_acts, ref_lps, ref_h))

    # --- single-step act() (T == 1) on a copy of the hidden state ------------
    v1, a1, lp1, h1 = net_policy_act(
        obs_T[0], jnp.array(h0), prev_actions[0], masks_T[0], params)
    jax.block_until_ready((v1, a1, lp1, h1))

    # --- fused T-step rollout (donates h0) ------------------------------------
    values, actions, log_probs, h_out = net_policy_act_rollout(
        obs_T, h0, prev_actions, masks_T, params)
    jax.block_until_ready((values, actions, log_probs, h_out))

    assert jnp.allclose(values, ref_vals, atol=1e-3), "value mismatch"
    assert jnp.array_equal(actions, ref_acts), "action mismatch"
    assert jnp.allclose(log_probs, ref_lps, atol=1e-3), "log_prob mismatch"
    assert jnp.allclose(h_out, ref_h, atol=1e-3), "hidden state mismatch"

    assert jnp.allclose(v1, ref_vals[0], atol=1e-3), "single-step value mismatch"
    assert jnp.array_equal(a1, ref_acts[0]), "single-step action mismatch"
    assert jnp.allclose(lp1, ref_lps[0], atol=1e-3), "single-step log_prob mismatch"
    assert jnp.allclose(h1, ref_feats[0], atol=1e-3), "single-step hidden mismatch"

    print("KERNEL_OK")
</pallas_src>

<mosaic_0001>
module attributes {stable_mosaic.version = 11 : i64} {
  func.func @_netpolicy_rollout_kernel(%arg0: i32, %arg1: i32, %arg2: memref<1x8x32xf32, #tpu.memory_space<vmem>>, %arg3: memref<8x128xf32, #tpu.memory_space<vmem>>, %arg4: memref<1x8x1xf32, #tpu.memory_space<vmem>>, %arg5: memref<32x128xbf16, #tpu.memory_space<vmem>>, %arg6: memref<128x128xbf16, #tpu.memory_space<vmem>>, %arg7: memref<1x128xf32, #tpu.memory_space<vmem>>, %arg8: memref<128x5xbf16, #tpu.memory_space<vmem>>, %arg9: memref<1x5xf32, #tpu.memory_space<vmem>>, %arg10: memref<1x8x128xf32, #tpu.memory_space<vmem>>, %arg11: memref<8x128xf32, #tpu.memory_space<vmem>>) attributes {dimension_semantics = [#tpu.dimension_semantics<parallel>, #tpu.dimension_semantics<arbitrary>], iteration_bounds = array<i64: 1, 1>, scalar_prefetch = 0 : i64, scratch_operands = 0 : i64, tpu.core_type = #tpu.core_type<tc>, window_params = [{transform_indices = @transform_0, window_bounds = array<i64: 1, 8, 32>}, {transform_indices = @transform_1, window_bounds = array<i64: 8, 128>}, {transform_indices = @transform_2, window_bounds = array<i64: 1, 8, 1>}, {pipeline_mode = #tpu.pipeline_mode<synchronous>, transform_indices = @transform_3, window_bounds = array<i64: 32, 128>}, {pipeline_mode = #tpu.pipeline_mode<synchronous>, transform_indices = @transform_4, window_bounds = array<i64: 128, 128>}, {pipeline_mode = #tpu.pipeline_mode<synchronous>, transform_indices = @transform_5, window_bounds = array<i64: 1, 128>}, {pipeline_mode = #tpu.pipeline_mode<synchronous>, transform_indices = @transform_6, window_bounds = array<i64: 128, 5>}, {pipeline_mode = #tpu.pipeline_mode<synchronous>, transform_indices = @transform_7, window_bounds = array<i64: 1, 5>}, {transform_indices = @transform_8, window_bounds = array<i64: 1, 8, 128>}, {transform_indices = @transform_9, window_bounds = array<i64: 8, 128>}]} {
    %c0_i32 = arith.constant 0 : i32
    %0 = arith.cmpi eq, %arg1, %c0_i32 : i32
    %1 = arith.extui %0 : i1 to i32
    %c0_i32_0 = arith.constant 0 : i32
    %2 = arith.cmpi ne, %1, %c0_i32_0 : i32
    scf.if %2 {
      %c0_37 = arith.constant 0 : index
      %c0_38 = arith.constant 0 : index
      %63 = vector.load %arg3[%c0_37, %c0_38] : memref<8x128xf32, #tpu.memory_space<vmem>>, vector<8x128xf32>
      %c0_39 = arith.constant 0 : index
      %c0_40 = arith.constant 0 : index
      %64 = vector.load %arg11[%c0_39, %c0_40] : memref<8x128xf32, #tpu.memory_space<vmem>>, vector<8x128xf32>
      tpu.vector_store %arg11[%c0_39, %c0_40], %63 {strides = array<i32>} : memref<8x128xf32, #tpu.memory_space<vmem>>, vector<8x128xf32>,
    } else {
    }
    %c0 = arith.constant 0 : index
    %c0_1 = arith.constant 0 : index
    %c0_2 = arith.constant 0 : index
    %3 = vector.load %arg2[%c0, %c0_1, %c0_2] : memref<1x8x32xf32, #tpu.memory_space<vmem>>, vector<1x8x32xf32>
    %4 = vector.shape_cast %3 : vector<1x8x32xf32> to vector<8x32xf32>
    %c0_3 = arith.constant 0 : index
    %c0_4 = arith.constant 0 : index
    %5 = vector.load %arg11[%c0_3, %c0_4] : memref<8x128xf32, #tpu.memory_space<vmem>>, vector<8x128xf32>
    %c0_5 = arith.constant 0 : index
    %c0_6 = arith.constant 0 : index
    %c0_7 = arith.constant 0 : index
    %6 = vector.load %arg4[%c0_5, %c0_6, %c0_7] : memref<1x8x1xf32, #tpu.memory_space<vmem>>, vector<1x8x1xf32>
    %7 = vector.shape_cast %6 : vector<1x8x1xf32> to vector<8x1xf32>
    %8 = vector.broadcast %7 : vector<8x1xf32> to vector<8x128xf32>
    %9 = arith.mulf %5, %8 : vector<8x128xf32>
    %10 = arith.truncf %4 : vector<8x32xf32> to vector<8x32xbf16>
    %c0_8 = arith.constant 0 : index
    %c0_9 = arith.constant 0 : index
    %11 = vector.load %arg5[%c0_8, %c0_9] : memref<32x128xbf16, #tpu.memory_space<vmem>>, vector<32x128xbf16>
    %cst = arith.constant dense<0.000000e+00> : vector<8x128xf32>
    %12 = tpu.matmul %10, %11, %cst {dimension_numbers = #tpu.dot_dimension_numbers<[1], [0], [0], [1], [0, 0, 1, 1], [], []>} : vector<8x32xbf16>, vector<32x128xbf16>, vector<8x128xf32> -> vector<8x128xf32>
    %13 = arith.truncf %9 : vector<8x128xf32> to vector<8x128xbf16>
    %c0_10 = arith.constant 0 : index
    %c0_11 = arith.constant 0 : index
    %14 = vector.load %arg6[%c0_10, %c0_11] : memref<128x128xbf16, #tpu.memory_space<vmem>>, vector<128x128xbf16>
    %cst_12 = arith.constant dense<0.000000e+00> : vector<8x128xf32>
    %15 = tpu.matmul %13, %14, %cst_12 {dimension_numbers = #tpu.dot_dimension_numbers<[1], [0], [0], [1], [0, 0, 1, 1], [], []>} : vector<8x128xbf16>, vector<128x128xbf16>, vector<8x128xf32> -> vector<8x128xf32>
    %16 = arith.addf %12, %15 : vector<8x128xf32>
    %c0_13 = arith.constant 0 : index
    %c0_14 = arith.constant 0 : index
    %17 = vector.load %arg7[%c0_13, %c0_14] : memref<1x128xf32, #tpu.memory_space<vmem>>, vector<1x128xf32>
    %18 = vector.broadcast %17 : vector<1x128xf32> to vector<8x128xf32>
    %19 = arith.addf %16, %18 : vector<8x128xf32>
    %20 = math.tanh %19 : vector<8x128xf32>
    %c0_15 = arith.constant 0 : index
    %c0_16 = arith.constant 0 : index
    %21 = vector.load %arg11[%c0_15, %c0_16] : memref<8x128xf32, #tpu.memory_space<vmem>>, vector<8x128xf32>
    tpu.vector_store %arg11[%c0_15, %c0_16], %20 {strides = array<i32>} : memref<8x128xf32, #tpu.memory_space<vmem>>, vector<8x128xf32>,
    %22 = arith.truncf %20 : vector<8x128xf32> to vector<8x128xbf16>
    %c0_17 = arith.constant 0 : index
    %c0_18 = arith.constant 0 : index
    %23 = vector.load %arg8[%c0_17, %c0_18] : memref<128x5xbf16, #tpu.memory_space<vmem>>, vector<128x5xbf16>
    %cst_19 = arith.constant dense<0.000000e+00> : vector<8x5xf32>
    %24 = tpu.matmul %22, %23, %cst_19 {dimension_numbers = #tpu.dot_dimension_numbers<[1], [0], [0], [1], [0, 0, 1, 1], [], []>} : vector<8x128xbf16>, vector<128x5xbf16>, vector<8x5xf32> -> vector<8x5xf32>
    %c0_20 = arith.constant 0 : index
    %c0_21 = arith.constant 0 : index
    %25 = vector.load %arg9[%c0_20, %c0_21] : memref<1x5xf32, #tpu.memory_space<vmem>>, vector<1x5xf32>
    %26 = vector.broadcast %25 : vector<1x5xf32> to vector<8x5xf32>
    %27 = arith.addf %24, %26 : vector<8x5xf32>
    %28 = vector.extract_strided_slice %27 {offsets = [0, 0], sizes = [8, 4], strides = [1, 1]} : vector<8x5xf32> to vector<8x4xf32>
    %29 = vector.extract_strided_slice %27 {offsets = [0, 4], sizes = [8, 1], strides = [1, 1]} : vector<8x5xf32> to vector<8x1xf32>
    %cst_22 = arith.constant dense<0xFF800000> : vector<8xf32>
    %30 = vector.multi_reduction <maximumf>, %28, %cst_22 [1] : vector<8x4xf32> to vector<8xf32>
    %31 = vector.shape_cast %30 : vector<8xf32> to vector<8x1xf32>
    %32 = tpu.iota {dimensions = array<i32: 1>} : vector<8x4xi32>
    %33 = vector.broadcast %31 : vector<8x1xf32> to vector<8x4xf32>
    %34 = arith.cmpf oeq, %28, %33 : vector<8x4xf32>
    %c4_i32 = arith.constant 4 : i32
    %35 = vector.broadcast %c4_i32 : i32 to vector<8x4xi32>
    %36 = arith.select %34, %32, %35 : vector<8x4xi1>, vector<8x4xi32>
    %cst_23 = arith.constant dense<2147483647> : vector<8xi32>
    %37 = vector.multi_reduction <minsi>, %36, %cst_23 [1] : vector<8x4xi32> to vector<8xi32>
    %38 = vector.shape_cast %37 : vector<8xi32> to vector<8x1xi32>
    %c3_i32 = arith.constant 3 : i32
    %39 = vector.broadcast %c3_i32 : i32 to vector<8x1xi32>
    %40 = arith.minsi %38, %39 : vector<8x1xi32>
    %41 = vector.broadcast %31 : vector<8x1xf32> to vector<8x4xf32>
    %42 = arith.subf %28, %41 : vector<8x4xf32>
    %43 = math.exp %42 : vector<8x4xf32>
    %cst_24 = arith.constant dense<0.000000e+00> : vector<8xf32>
    %44 = vector.multi_reduction <add>, %43, %cst_24 [1] : vector<8x4xf32> to vector<8xf32>
    %45 = vector.shape_cast %44 : vector<8xf32> to vector<8x1xf32>
    %46 = math.log %45 : vector<8x1xf32>
    %cst_25 = arith.constant 0.000000e+00 : f32
    %47 = vector.broadcast %cst_25 : f32 to vector<8x1xf32>
    %48 = arith.subf %47, %46 : vector<8x1xf32>
    %cst_26 = arith.constant 0.000000e+00 : f32
    %49 = vector.broadcast %cst_26 : f32 to vector<8x128xf32>
    %c0_27 = arith.constant 0 : index
    %c0_28 = arith.constant 0 : index
    %c0_29 = arith.constant 0 : index
    %50 = vector.load %arg10[%c0_27, %c0_28, %c0_29] : memref<1x8x128xf32, #tpu.memory_space<vmem>>, vector<1x8x128xf32>
    %51 = vector.shape_cast %50 : vector<1x8x128xf32> to vector<8x128xf32>
    %52 = vector.shape_cast %49 : vector<8x128xf32> to vector<1x8x128xf32>
    tpu.vector_store %arg10[%c0_27, %c0_28, %c0_29], %52 {strides = array<i32>} : memref<1x8x128xf32, #tpu.memory_space<vmem>>, vector<1x8x128xf32>,
    %c0_30 = arith.constant 0 : index
    %c0_31 = arith.constant 0 : index
    %c0_32 = arith.constant 0 : index
    %53 = vector.load %arg10[%c0_30, %c0_31, %c0_32] : memref<1x8x128xf32, #tpu.memory_space<vmem>>, vector<1x8x1xf32>
    %54 = vector.shape_cast %53 : vector<1x8x1xf32> to vector<8x1xf32>
    %55 = vector.shape_cast %29 : vector<8x1xf32> to vector<1x8x1xf32>
    tpu.vector_store %arg10[%c0_30, %c0_31, %c0_32], %55 {strides = array<i32>} : memref<1x8x128xf32, #tpu.memory_space<vmem>>, vector<1x8x1xf32>,
    %c0_33 = arith.constant 0 : index
    %c0_34 = arith.constant 0 : index
    %c1 = arith.constant 1 : index
    %56 = vector.load %arg10[%c0_33, %c0_34, %c1] : memref<1x8x128xf32, #tpu.memory_space<vmem>>, vector<1x8x1xf32>
    %57 = vector.shape_cast %56 : vector<1x8x1xf32> to vector<8x1xf32>
    %58 = vector.shape_cast %48 : vector<8x1xf32> to vector<1x8x1xf32>
    tpu.vector_store %arg10[%c0_33, %c0_34, %c1], %58 {strides = array<i32>} : memref<1x8x128xf32, #tpu.memory_space<vmem>>, vector<1x8x1xf32>,
    %59 = arith.sitofp %40 : vector<8x1xi32> to vector<8x1xf32>
    %c0_35 = arith.constant 0 : index
    %c0_36 = arith.constant 0 : index
    %c2 = arith.constant 2 : index
    %60 = vector.load %arg10[%c0_35, %c0_36, %c2] : memref<1x8x128xf32, #tpu.memory_space<vmem>>, vector<1x8x1xf32>
    %61 = vector.shape_cast %60 : vector<1x8x1xf32> to vector<8x1xf32>
    %62 = vector.shape_cast %59 : vector<8x1xf32> to vector<1x8x1xf32>
    tpu.vector_store %arg10[%c0_35, %c0_36, %c2], %62 {strides = array<i32>} : memref<1x8x128xf32, #tpu.memory_space<vmem>>, vector<1x8x1xf32>,
    return
  }
  func.func @transform_0(%arg0: i32, %arg1: i32) -> (i32, i32, i32) {
    %c0_i32 = arith.constant 0 : i32
    %c0_i32_0 = arith.constant 0 : i32
    return %arg1, %arg0, %c0_i32 : i32, i32, i32
  }
  func.func @transform_1(%arg0: i32, %arg1: i32) -> (i32, i32) {
    %c0_i32 = arith.constant 0 : i32
    %c0_i32_0 = arith.constant 0 : i32
    return %arg0, %c0_i32 : i32, i32
  }
  func.func @transform_2(%arg0: i32, %arg1: i32) -> (i32, i32, i32) {
    %c0_i32 = arith.constant 0 : i32
    %c0_i32_0 = arith.constant 0 : i32
    return %arg1, %arg0, %c0_i32 : i32, i32, i32
  }
  func.func @transform_3(%arg0: i32, %arg1: i32) -> (i32, i32) {
    %c0_i32 = arith.constant 0 : i32
    %c0_i32_0 = arith.constant 0 : i32
    %c0_i32_1 = arith.constant 0 : i32
    return %c0_i32, %c0_i32_0 : i32, i32
  }
  func.func @transform_4(%arg0: i32, %arg1: i32) -> (i32, i32) {
    %c0_i32 = arith.constant 0 : i32
    %c0_i32_0 = arith.constant 0 : i32
    %c0_i32_1 = arith.constant 0 : i32
    return %c0_i32, %c0_i32_0 : i32, i32
  }
  func.func @transform_5(%arg0: i32, %arg1: i32) -> (i32, i32) {
    %c0_i32 = arith.constant 0 : i32
    %c0_i32_0 = arith.constant 0 : i32
    %c0_i32_1 = arith.constant 0 : i32
    return %c0_i32, %c0_i32_0 : i32, i32
  }
  func.func @transform_6(%arg0: i32, %arg1: i32) -> (i32, i32) {
    %c0_i32 = arith.constant 0 : i32
    %c0_i32_0 = arith.constant 0 : i32
    %c0_i32_1 = arith.constant 0 : i32
    return %c0_i32, %c0_i32_0 : i32, i32
  }
  func.func @transform_7(%arg0: i32, %arg1: i32) -> (i32, i32) {
    %c0_i32 = arith.constant 0 : i32
    %c0_i32_0 = arith.constant 0 : i32
    %c0_i32_1 = arith.constant 0 : i32
    return %c0_i32, %c0_i32_0 : i32, i32
  }
  func.func @transform_8(%arg0: i32, %arg1: i32) -> (i32, i32, i32) {
    %c0_i32 = arith.constant 0 : i32
    %c0_i32_0 = arith.constant 0 : i32
    return %arg1, %arg0, %c0_i32 : i32, i32, i32
  }
  func.func @transform_9(%arg0: i32, %arg1: i32) -> (i32, i32) {
    %c0_i32 = arith.constant 0 : i32
    %c0_i32_0 = arith.constant 0 : i32
    return %arg0, %c0_i32 : i32, i32
  }
}

</mosaic_0001>

<llo_original>
// kernel: net_policy_act_rollout.1
$region0: #{net_policy_act_rollout.1}
  #allocation0 [shape = 'u32[]', space=smem, size = 0x4, offset = 0x4, fixed_abs, tag = 'smem constant byte address 0x4 - core index']
  #allocation1 [shape = 'u32[144,128]{1,0:T(1,128)}', space=vmem, size = 0x12000, scoped, tag = 'internal scratch']
  %s0 = inlined_call_operand.hbm [shape: f32[1,8,32], index: 0, kind: input, shape index: {}]
  %s1 = inlined_call_operand.hbm [shape: f32[8,128], index: 1, kind: input, shape index: {}, may-alias: {1,9}]
  %s2 = inlined_call_operand.vmem [shape: f32[1,8,1], index: 2, kind: input, shape index: {}]
  %s3 = inlined_call_operand.vmem [shape: bf16[32,128], index: 3, kind: input, shape index: {}]
  %s4 = inlined_call_operand.vmem [shape: bf16[128,128], index: 4, kind: input, shape index: {}]
  %s5 = inlined_call_operand.vmem [shape: f32[1,128], index: 5, kind: input, shape index: {}]
  %s6 = inlined_call_operand.vmem [shape: bf16[128,5], index: 6, kind: input, shape index: {}]
  %s7 = inlined_call_operand.vmem [shape: f32[1,5], index: 7, kind: input, shape index: {}]
  %s8 = inlined_call_operand.vmem [shape: f32[1,8,128], index: 8, kind: output, shape index: {0}]
  %s9 = inlined_call_operand.hbm [shape: f32[8,128], index: 9, kind: output, shape index: {1}, may-alias: {1,9}]
  %10 = xla_tuple %s8, %s9
  %s11 = sld [smem:[#allocation0]]
  $region62: #{net_policy_act_rollout.1} parent=0
    _
  %s13 = ssub.s32 1, %s11
  %s14 = scalar_select 0, %s13, %s11
  $region1: #{net_policy_act_rollout.1} parent=0
    #allocation2 [shape = 'u8[4096]{0}', space=vmem, size = 0x1000, scoped, tag = 'input window, operand 0, single buffered']
    #allocation3 [shape = 's32[1]{0}', space=sflag, size = 0x4, scoped, tag = 'scoped memory for net_policy_act_rollout.1']
    #allocation4 [shape = 's32[1]{0}', space=sflag, size = 0x4, scoped, tag = 'scoped memory for net_policy_act_rollout.1']
    #allocation5 [shape = 'u8[4096]{0}', space=vmem, size = 0x1000, scoped, tag = 'input window, operand 1, single buffered']
    #allocation6 [shape = 's32[1]{0}', space=sflag, size = 0x4, scoped, tag = 'scoped memory for net_policy_act_rollout.1']
    #allocation7 [shape = 'u8[4096]{0}', space=vmem, size = 0x1000, scoped, tag = 'output window, operand 1, single buffered']
    %15 = vsyncpa [#allocation3], 0
    %16 = vsyncpa [#allocation6], 0
    %17 = vsyncpa [#allocation4], 0
    // Predicated region
    $region2: #{net_policy_act_rollout.1} parent=1 // pred_check
      _
    $region3: #{net_policy_act_rollout.1} parent=1 // pred_check_branch
      %19 = sbr.rel (0) target = $region5
    $region4: #{net_policy_act_rollout.1} parent=1 // pred_region
      %s21 = ssub.s32 128, 128
      %22 = vsyncadd [#allocation3], %s21
      %s24 = sshll.u32 [#allocation2], 4
      %s25 = int_to_ptr.vmem [resolvable:$true] %s24
      %27 = dma.hbm_to_vmem [thread:$0]  %s0, 128, %s25, [#allocation3]
    $region5: #{net_policy_act_rollout.1} parent=1 // pred_fallthru
      _
    // Predicated region
    $region6: #{net_policy_act_rollout.1} parent=1 // pred_check
      _
    $region7: #{net_policy_act_rollout.1} parent=1 // pred_check_branch
      %29 = sbr.rel (0) target = $region9
    $region8: #{net_policy_act_rollout.1} parent=1 // pred_region
      %s31 = ssub.s32 128, 128
      %32 = vsyncadd [#allocation6], %s31
      %s34 = sshll.u32 [#allocation5], 4
      %s35 = int_to_ptr.vmem [resolvable:$true] %s34
      %37 = dma.hbm_to_vmem [thread:$0]  %s1, 128, %s35, [#allocation6]
    $region9: #{net_policy_act_rollout.1} parent=1 // pred_fallthru
      _
    // Predicated region
    $region10: #{net_policy_act_rollout.1} parent=1 // pred_check
      _
    $region11: #{net_policy_act_rollout.1} parent=1 // pred_check_branch
      %39 = sbr.rel (0) target = $region13
    $region12: #{net_policy_act_rollout.1} parent=1 // pred_region
      _
    $region13: #{net_policy_act_rollout.1} parent=1 // pred_fallthru
      _
    // Predicated region
    $region14: #{net_policy_act_rollout.1} parent=1 // pred_check
      _
    $region15: #{net_policy_act_rollout.1} parent=1 // pred_check_branch
      %41 = sbr.rel (0) target = $region17
    $region16: #{net_policy_act_rollout.1} parent=1 // pred_region
      _
    $region17: #{net_policy_act_rollout.1} parent=1 // pred_fallthru
      _
    // Predicated region
    $region18: #{net_policy_act_rollout.1} parent=1 // pred_check
      _
    $region19: #{net_policy_act_rollout.1} parent=1 // pred_check_branch
      %43 = sbr.rel (0) target = $region21
    $region20: #{net_policy_act_rollout.1} parent=1 // pred_region
      _
    $region21: #{net_policy_act_rollout.1} parent=1 // pred_fallthru
      _
    // Predicated region
    $region22: #{net_policy_act_rollout.1} parent=1 // pred_check
      _
    $region23: #{net_policy_act_rollout.1} parent=1 // pred_check_branch
      %45 = sbr.rel (0) target = $region25
    $region24: #{net_policy_act_rollout.1} parent=1 // pred_region
      _
    $region25: #{net_policy_act_rollout.1} parent=1 // pred_fallthru
      _
    // Predicated region
    $region26: #{net_policy_act_rollout.1} parent=1 // pred_check
      _
    $region27: #{net_policy_act_rollout.1} parent=1 // pred_check_branch
      %47 = sbr.rel (0) target = $region29
    $region28: #{net_policy_act_rollout.1} parent=1 // pred_region
      _
    $region29: #{net_policy_act_rollout.1} parent=1 // pred_fallthru
      _
    // Predicated region
    $region30: #{net_policy_act_rollout.1} parent=1 // pred_check
      _
    $region31: #{net_policy_act_rollout.1} parent=1 // pred_check_branch
      %49 = sbr.rel (0) target = $region33
    $region32: #{net_policy_act_rollout.1} parent=1 // pred_region
      _
    $region33: #{net_policy_act_rollout.1} parent=1 // pred_fallthru
      _
    // Predicated region
    $region34: #{net_policy_act_rollout.1} parent=1 // pred_check
      _
    $region35: #{net_policy_act_rollout.1} parent=1 // pred_check_branch
      %51 = sbr.rel (0) target = $region37
    $region36: #{net_policy_act_rollout.1} parent=1 // pred_region
      %52 = dma.done [#allocation3], 128
    $region37: #{net_policy_act_rollout.1} parent=1 // pred_fallthru
      _
    // Predicated region
    $region38: #{net_policy_act_rollout.1} parent=1 // pred_check
      _
    $region39: #{net_policy_act_rollout.1} parent=1 // pred_check_branch
      %54 = sbr.rel (0) target = $region41
    $region40: #{net_policy_act_rollout.1} parent=1 // pred_region
      %55 = dma.done [#allocation6], 128
    $region41: #{net_policy_act_rollout.1} parent=1 // pred_fallthru
      _
    %p57 = scmp.eq.s32.totalorder 0, 0
    // Predicated region
    $region42: #{net_policy_act_rollout.1} parent=1 // pred_check
      %p58 = pneg %p57
    $region43: #{net_policy_act_rollout.1} parent=1 // pred_check_branch
      %60 = sbr.rel (%p58) target = $region45
    $region44: #{net_policy_act_rollout.1} parent=1 // pred_region
      %v61 = vld [vmem:[#allocation5] sm:$0xff]
      %62 = vst [vmem:[#allocation7] sm:$0xff] %v61
    $region45: #{net_policy_act_rollout.1} parent=1 // pred_fallthru
      _
    %v63 = vld [vmem:[#allocation2] sm:$0xff]
    %v64 = vld [vmem:[#allocation7] sm:$0xff]
    %v65 = vld [vmem:[%s2] sm:$0xff]
    %67 = vset.pattern.permute.xlu0 0
    %68 = vperm.xlu0 %67, %v65
    %v69 = vpop.permute.xlu0 %68
    %v71 = vmul.f32 %v64, %v69
    %v72 = vpack.c.bf16 %v63, %v63
    %v73 = vld [vmem:[%s3] sm:$0xf]
    %v74 = vld [vmem:[%s3 + $0x4] sm:$0xf]
    %v75 = vld [vmem:[%s3 + $0x8] sm:$0xf]
    %v76 = vld [vmem:[%s3 + $0xc] sm:$0xf]
    %v77 = vpack.c.bf16 %v71, %v71
    %v78 = vld [vmem:[%s4] sm:$0xf]
    %v79 = vld [vmem:[%s4 + $0x4] sm:$0xf]
    %v80 = vld [vmem:[%s4 + $0x8] sm:$0xf]
    %v81 = vld [vmem:[%s4 + $0xc] sm:$0xf]
    %v82 = vld [vmem:[%s4 + $0x10] sm:$0xf]
    %v83 = vld [vmem:[%s4 + $0x14] sm:$0xf]
    %v84 = vld [vmem:[%s4 + $0x18] sm:$0xf]
    %v85 = vld [vmem:[%s4 + $0x1c] sm:$0xf]
    %v86 = vld [vmem:[%s4 + $0x20] sm:$0xf]
    %v87 = vld [vmem:[%s4 + $0x24] sm:$0xf]
    %v88 = vld [vmem:[%s4 + $0x28] sm:$0xf]
    %v89 = vld [vmem:[%s4 + $0x2c] sm:$0xf]
    %v90 = vld [vmem:[%s4 + $0x30] sm:$0xf]
    %v91 = vld [vmem:[%s4 + $0x34] sm:$0xf]
    %v92 = vld [vmem:[%s4 + $0x38] sm:$0xf]
    %v93 = vld [vmem:[%s4 + $0x3c] sm:$0xf]
    %v110 = vunpack.c.l.b16 %v78
    %v111 = vunpack.c.l.b16 %v79
    %v112 = vunpack.c.l.b16 %v80
    %v113 = vunpack.c.l.b16 %v81
    %v114 = vunpack.c.l.b16 %v82
    %v115 = vunpack.c.l.b16 %v83
    %v116 = vunpack.c.l.b16 %v84
    %v117 = vunpack.c.l.b16 %v85
    %v118 = vunpack.c.l.b16 %v86
    %v119 = vunpack.c.l.b16 %v87
    %v120 = vunpack.c.l.b16 %v88
    %v121 = vunpack.c.l.b16 %v89
    %v122 = vunpack.c.l.b16 %v90
    %v123 = vunpack.c.l.b16 %v91
    %v124 = vunpack.c.l.b16 %v92
    %v125 = vunpack.c.l.b16 %v93
    %v126 = vpack.c.b16 %v111, %v110
    %v127 = vpack.c.b16 %v113, %v112
    %v128 = vpack.c.b16 %v115, %v114
    %v129 = vpack.c.b16 %v117, %v116
    %v130 = vpack.c.b16 %v119, %v118
    %v131 = vpack.c.b16 %v121, %v120
    %v132 = vpack.c.b16 %v123, %v122
    %v133 = vpack.c.b16 %v125, %v124
    %142 = vmatprep.subr.bf16.mxu0 0
    %143 = vmatpush1.bf16.msra.mxu0 %v133
    %144 = vmatprep.subr.bf16.mxu0 0
    %145 = vmatpush1.bf16.msra.mxu0 %v132
    %146 = vmatprep.subr.bf16.mxu0 0
    %147 = vmatpush1.bf16.msra.mxu0 %v131
    %148 = vmatprep.subr.bf16.mxu0 0
    %149 = vmatpush1.bf16.msra.mxu0 %v130
    %150 = vmatprep.subr.bf16.mxu0 0
    %151 = vmatpush1.bf16.msra.mxu0 %v129
    %152 = vmatprep.subr.bf16.mxu0 0
    %153 = vmatpush1.bf16.msra.mxu0 %v128
    %154 = vmatprep.subr.bf16.mxu0 0
    %155 = vmatpush1.bf16.msra.mxu0 %v127
    %156 = vmatprep.subr.bf16.mxu0 0
    %157 = vmatpush1.bf16.msra.mxu0 %v126
    %158 = vmatprep.subr.bf16.mxu0 0
    %159 = vmatpush2.bf16.msra.mxu0 0
    %160 = vmatprep.subr.bf16.mxu0 0
    %161 = vmatpush2.bf16.msra.mxu0 0
    %162 = vmatprep.subr.bf16.mxu0 0
    %163 = vmatpush2.bf16.msra.mxu0 0
    %164 = vmatprep.subr.bf16.mxu0 0
    %165 = vmatpush2.bf16.msra.mxu0 0
    %166 = vmatprep.subr.bf16.mxu0 0
    %167 = vmatpush2.bf16.msra.mxu0 0
    %168 = vmatprep.subr.bf16.mxu0 0
    %169 = vmatpush2.bf16.msra.mxu0 0
    %170 = vmatprep.subr.bf16.mxu0 0
    %171 = vmatpush2.bf16.msra.mxu0 0
    %172 = vmatprep.subr.bf16.mxu0 0
    %173 = vmatpush2.bf16.msra.mxu0 0
    %174 = vmatprep.mubr.bf16.mxu0 0
    %175 = vmatmul.mubr.bf16.gmra.mxu0 %v77
    %v176 = vpop.f32.mrf.mxu0
    %v177 = vadd.f32 0.0, %v176
    %v178 = vpop.f32.mrf.mxu0
    %v179 = vpop.f32.mrf.mxu0
    %v180 = vpop.f32.mrf.mxu0
    %181 = vdwg.mxu0
    %v186 = vunpack.c.l.b16 %v73
    %v187 = vunpack.c.l.b16 %v74
    %v188 = vunpack.c.l.b16 %v75
    %v189 = vunpack.c.l.b16 %v76
    %v190 = vpack.c.b16 %v187, %v186
    %v191 = vpack.c.b16 %v189, %v188
    %vm194 = vcmask 261120
    %v196 = vsel %vm194, %v72, 0
    %198 = vmatprep.subr.bf16.mxu0 0
    %199 = vmatpush1.bf16.msra.mxu0 0
    %200 = vmatprep.subr.bf16.mxu0 0
    %201 = vmatpush1.bf16.msra.mxu0 0
    %202 = vmatprep.subr.bf16.mxu0 0
    %203 = vmatpush1.bf16.msra.mxu0 0
    %204 = vmatprep.subr.bf16.mxu0 0
    %205 = vmatpush1.bf16.msra.mxu0 0
    %206 = vmatprep.subr.bf16.mxu0 0
    %207 = vmatpush1.bf16.msra.mxu0 0
    %208 = vmatprep.subr.bf16.mxu0 0
    %209 = vmatpush1.bf16.msra.mxu0 0
    %210 = vmatprep.subr.bf16.mxu0 0
    %211 = vmatpush1.bf16.msra.mxu0 %v191
    %212 = vmatprep.subr.bf16.mxu0 0
    %213 = vmatpush1.bf16.msra.mxu0 %v190
    %214 = vmatprep.subr.bf16.mxu0 0
    %215 = vmatpush2.bf16.msra.mxu0 0
    %216 = vmatprep.subr.bf16.mxu0 0
    %217 = vmatpush2.bf16.msra.mxu0 0
    %218 = vmatprep.subr.bf16.mxu0 0
    %219 = vmatpush2.bf16.msra.mxu0 0
    %220 = vmatprep.subr.bf16.mxu0 0
    %221 = vmatpush2.bf16.msra.mxu0 0
    %222 = vmatprep.subr.bf16.mxu0 0
    %223 = vmatpush2.bf16.msra.mxu0 0
    %224 = vmatprep.subr.bf16.mxu0 0
    %225 = vmatpush2.bf16.msra.mxu0 0
    %226 = vmatprep.subr.bf16.mxu0 0
    %227 = vmatpush2.bf16.msra.mxu0 0
    %228 = vmatprep.subr.bf16.mxu0 0
    %229 = vmatpush2.bf16.msra.mxu0 0
    %230 = vmatprep.mubr.bf16.mxu0 0
    %231 = vmatmul.mubr.bf16.gmra.mxu0 %v196
    %v232 = vpop.f32.mrf.mxu0
    %v233 = vadd.f32 %v177, %v232
    %v234 = vpop.f32.mrf.mxu0
    %v235 = vpop.f32.mrf.mxu0
    %v236 = vpop.f32.mrf.mxu0
    %237 = vdwg.mxu0
    %v238 = vld [vmem:[%s5] sm:$0x1]
    %v240 = vlaneseq
    %v241 = vshrl.u32 %v240, 7
    %v242 = vsub.s32 0, %v241
    %v243 = vrot.slane %v238, %v242
    %v245 = vadd.f32 %v233, %v243
    %v246 = vtanh.pop %v245
    %247 = vst [vmem:[#allocation7] sm:$0xff] %v246
    %v248 = vpack.c.bf16 %v246, %v246
    %v249 = vld [vmem:[%s6] sm:$0xf]
    %v250 = vld [vmem:[%s6 + $0x4] sm:$0xf]
    %v251 = vld [vmem:[%s6 + $0x8] sm:$0xf]
    %v252 = vld [vmem:[%s6 + $0xc] sm:$0xf]
    %v253 = vld [vmem:[%s6 + $0x10] sm:$0xf]
    %v254 = vld [vmem:[%s6 + $0x14] sm:$0xf]
    %v255 = vld [vmem:[%s6 + $0x18] sm:$0xf]
    %v256 = vld [vmem:[%s6 + $0x1c] sm:$0xf]
    %v257 = vld [vmem:[%s6 + $0x20] sm:$0xf]
    %v258 = vld [vmem:[%s6 + $0x24] sm:$0xf]
    %v259 = vld [vmem:[%s6 + $0x28] sm:$0xf]
    %v260 = vld [vmem:[%s6 + $0x2c] sm:$0xf]
    %v261 = vld [vmem:[%s6 + $0x30] sm:$0xf]
    %v262 = vld [vmem:[%s6 + $0x34] sm:$0xf]
    %v263 = vld [vmem:[%s6 + $0x38] sm:$0xf]
    %v264 = vld [vmem:[%s6 + $0x3c] sm:$0xf]
    %v265 = vld [vmem:[%s7] sm:$0x1]
    %v267 = vlaneseq
    %v268 = vshrl.u32 %v267, 7
    %v269 = vsub.s32 0, %v268
    %v270 = vrot.slane %v265, %v269
    %v288 = vunpack.c.l.b16 %v249
    %v289 = vunpack.c.l.b16 %v250
    %v290 = vunpack.c.l.b16 %v251
    %v291 = vunpack.c.l.b16 %v252
    %v292 = vunpack.c.l.b16 %v253
    %v293 = vunpack.c.l.b16 %v254
    %v294 = vunpack.c.l.b16 %v255
    %v295 = vunpack.c.l.b16 %v256
    %v296 = vunpack.c.l.b16 %v257
    %v297 = vunpack.c.l.b16 %v258
    %v298 = vunpack.c.l.b16 %v259
    %v299 = vunpack.c.l.b16 %v260
    %v300 = vunpack.c.l.b16 %v261
    %v301 = vunpack.c.l.b16 %v262
    %v302 = vunpack.c.l.b16 %v263
    %v303 = vunpack.c.l.b16 %v264
    %v304 = vpack.c.b16 %v289, %v288
    %v305 = vpack.c.b16 %v291, %v290
    %v306 = vpack.c.b16 %v293, %v292
    %v307 = vpack.c.b16 %v295, %v294
    %v308 = vpack.c.b16 %v297, %v296
    %v309 = vpack.c.b16 %v299, %v298
    %v310 = vpack.c.b16 %v301, %v300
    %v311 = vpack.c.b16 %v303, %v302
    %320 = vmatprep.subr.bf16.mxu0 0
    %321 = vmatpush1.bf16.msra.mxu0 %v311
    %322 = vmatprep.subr.bf16.mxu0 0
    %323 = vmatpush1.bf16.msra.mxu0 %v310
    %324 = vmatprep.subr.bf16.mxu0 0
    %325 = vmatpush1.bf16.msra.mxu0 %v309
    %326 = vmatprep.subr.bf16.mxu0 0
    %327 = vmatpush1.bf16.msra.mxu0 %v308
    %328 = vmatprep.subr.bf16.mxu0 0
    %329 = vmatpush1.bf16.msra.mxu0 %v307
    %330 = vmatprep.subr.bf16.mxu0 0
    %331 = vmatpush1.bf16.msra.mxu0 %v306
    %332 = vmatprep.subr.bf16.mxu0 0
    %333 = vmatpush1.bf16.msra.mxu0 %v305
    %334 = vmatprep.subr.bf16.mxu0 0
    %335 = vmatpush1.bf16.msra.mxu0 %v304
    %336 = vmatprep.subr.bf16.mxu0 0
    %337 = vmatpush2.bf16.msra.mxu0 0
    %338 = vmatprep.subr.bf16.mxu0 0
    %339 = vmatpush2.bf16.msra.mxu0 0
    %340 = vmatprep.subr.bf16.mxu0 0
    %341 = vmatpush2.bf16.msra.mxu0 0
    %342 = vmatprep.subr.bf16.mxu0 0
    %343 = vmatpush2.bf16.msra.mxu0 0
    %344 = vmatprep.subr.bf16.mxu0 0
    %345 = vmatpush2.bf16.msra.mxu0 0
    %346 = vmatprep.subr.bf16.mxu0 0
    %347 = vmatpush2.bf16.msra.mxu0 0
    %348 = vmatprep.subr.bf16.mxu0 0
    %349 = vmatpush2.bf16.msra.mxu0 0
    %350 = vmatprep.subr.bf16.mxu0 0
    %351 = vmatpush2.bf16.msra.mxu0 0
    %352 = vmatprep.mubr.bf16.mxu0 0
    %353 = vmatmul.mubr.bf16.gmra.mxu0 %v248
    %v354 = vpop.f32.mrf.mxu0
    %v355 = vadd.f32 %v270, %v354
    %v356 = vpop.f32.mrf.mxu0
    %v357 = vpop.f32.mrf.mxu0
    %v358 = vpop.f32.mrf.mxu0
    %359 = vdwg.mxu0
    %vm360 = vcmask 31744
    %v361 = vsel %vm360, %v355, -inf
    %362 = vmax.xlane.f32.xlu0 %v361
    %v363 = vpop.xlane.xlu0 %362
    %v364 = vlaneseq
    %v365 = vand.u32 %v364, 127
    %vm366 = vcmp.eq.f32.partialorder %v355, %v363
    %v367 = vsel %vm366, %v365, 4
    %v368 = vsel %vm360, %v367, 2147483647
    %v369 = vand.u32 %v368, 65535
    %v370 = vshra.s32 %v368, 16
    %v371 = vcvt.s32.f32 %v369
    %v372 = vcvt.s32.f32 %v370
    %373 = vmin.xlane.f32.xlu0 %v372
    %v374 = vpop.xlane.xlu0 %373
    %vm375 = vcmp.eq.f32.partialorder %v372, %v374
    %v376 = vsel %vm375, %v371, inf
    %377 = vmin.xlane.f32.xlu0 %v376
    %v378 = vpop.xlane.xlu0 %377
    %v379 = vcvt.f32.s32 %v378
    %v380 = vcvt.f32.s32 %v374
    %v381 = vshll.u32 %v380, 16
    %v382 = vadd.s32 %v381, %v379
    %vm383 = vcmp.lt.s32.totalorder %v382, 3
    %v384 = vsel %vm383, %v382, 3
    %v385 = vsub.f32 %v355, %v363
    %v386 = vmul.f32 %v385, 1.442695
    %v387 = vpow.pop %v386
    %v388 = vsel %vm360, %v387, 0.0
    %389 = vadd.xlane.f32.xlu0 %v388
    %v390 = vpop.xlane.xlu0 %389
    %v391 = vlog2.pop %v390
    %v392 = vmul.f32 %v391, 0.6931472
    %v393 = vsub.f32 0.0, %v392
    %394 = vst [vmem:[%s8] sm:$0xff] 0.0
    %396 = vrot.lane.b32.xlu0 %v355, 124
    %v397 = vpop.permute.xlu0 %396
    %vm399 = vcmask 7168
    %400 = vst.msk [vmem:[%s8] sm:$0xff] %vm399, %v397
    %vm401 = vcmask 15368
    %402 = vst.msk [vmem:[%s8] sm:$0xff] %vm401, %v393
    %v403 = vcvt.s32.f32 %v384
    %vm404 = vcmask 23568
    %405 = vst.msk [vmem:[%s8] sm:$0xff] %vm404, %v403
    // Predicated region
    $region46: #{net_policy_act_rollout.1} parent=1 // pred_check
      _
    $region47: #{net_policy_act_rollout.1} parent=1 // pred_check_branch
      %407 = sbr.rel (0) target = $region49
    $region48: #{net_policy_act_rollout.1} parent=1 // pred_region
      _
    $region49: #{net_policy_act_rollout.1} parent=1 // pred_fallthru
      _
    // Predicated region
    $region50: #{net_policy_act_rollout.1} parent=1 // pred_check
      _
    $region51: #{net_policy_act_rollout.1} parent=1 // pred_check_branch
      %409 = sbr.rel (0) target = $region53
    $region52: #{net_policy_act_rollout.1} parent=1 // pred_region
      %s411 = ssub.s32 128, 128
      %412 = vsyncadd [#allocation4], %s411
      %s414 = sshll.u32 [#allocation7], 4
      %s415 = int_to_ptr.vmem [resolvable:$true] %s414
      %417 = dma.vmem_to_hbm [thread:$0]  %s415, 128, %s9, [#allocation4]
    $region53: #{net_policy_act_rollout.1} parent=1 // pred_fallthru
      _
    // Predicated region
    $region54: #{net_policy_act_rollout.1} parent=1 // pred_check
      _
    $region55: #{net_policy_act_rollout.1} parent=1 // pred_check_branch
      %419 = sbr.rel (0) target = $region57
    $region56: #{net_policy_act_rollout.1} parent=1 // pred_region
      _
    $region57: #{net_policy_act_rollout.1} parent=1 // pred_fallthru
      _
    // Predicated region
    $region58: #{net_policy_act_rollout.1} parent=1 // pred_check
      _
    $region59: #{net_policy_act_rollout.1} parent=1 // pred_check_branch
      %421 = sbr.rel (0) target = $region61
    $region60: #{net_policy_act_rollout.1} parent=1 // pred_region
      %422 = dma.done [#allocation4], 128
    $region61: #{net_policy_act_rollout.1} parent=1 // pred_fallthru
      _
    %423 = vsyncpa [#allocation3], 1
    %424 = vsyncpa [#allocation6], 1
    %425 = vsyncpa [#allocation4], 1

</llo_original>
